<compile_context>
chip_gen: v5e
topology: v5e:2x2
jax: 0.10.0
libtpu: 0.0.40
codegen_flags: <defaults>
</compile_context>

<pallas_src>
import numpy as np
import jax
import jax.numpy as jnp
from jax import lax
from jax.experimental import pallas as pl
from jax.experimental.pallas import tpu as pltpu


def _ssl_clip_loss_kernel(scales_ref, colsc_ref, gt_ref, img_ref, txt_ref,
                          out_ref, col_l_ref, m_run_ref, acc_ref):
    tm, d = img_ref.shape          # row-tile of image embeddings
    n = txt_ref.shape[0]           # full batch (columns of the logits slab)
    n_tiles = pl.num_programs(0)
    i = pl.program_id(0)
    i0 = pl.multiple_of(i * tm, tm)

    sqrt_ls = scales_ref[0]        # sqrt(logit_scale)        (gt samples)
    sqrt_lsp = scales_ref[1]       # sqrt(logit_scale_pseudo) (pseudo samples)

    @pl.when(i == 0)
    def _init():
        col_l_ref[...] = jnp.zeros_like(col_l_ref)
        m_run_ref[...] = jnp.full_like(m_run_ref, -jnp.inf)
        acc_ref[...] = jnp.zeros_like(acc_ref)
        out_ref[...] = jnp.zeros_like(out_ref)     # never flush garbage

    gt_tile = gt_ref[...]                                      # (TM, 1) f32 {0,1}
    row_scale = jnp.where(gt_tile == 1.0, sqrt_ls, sqrt_lsp)   # (TM, 1)

    in_dtype = img_ref.dtype
    # Fold sqrt(s_row) into the image MXU operand only (O(TM*D) per tile).
    img_op = (img_ref[...].astype(jnp.float32) * row_scale).astype(in_dtype)

    # Contraction on the last dim of both operands == flash-attention Q·K^T pattern;
    # no per-tile relayout of the resident txt slab.
    dn = (((1,), (1,)), ((), ()))
    raw = lax.dot_general(img_op, txt_ref[...], dn,
                          preferred_element_type=jnp.float32)   # (TM, N) f32
    # Column scale applied post-matmul as one lane-broadcast multiply.
    logits = raw * colsc_ref[...]                               # (TM, N)

    # ---- image-side cross-entropy (exact per row: all columns are in the slab) ----
    row_max = jnp.max(logits, axis=-1, keepdims=True)           # (TM, 1)
    p = jnp.exp(logits - row_max)                               # (TM, N) single exp pass
    row_lse = jnp.log(jnp.sum(p, axis=-1, keepdims=True)) + row_max   # (TM, 1)

    # ---- diagonal targets + accuracy, extracted from the SAME scaled slab ----
    col_ids = lax.broadcasted_iota(jnp.int32, (tm, n), 1)
    labels = lax.broadcasted_iota(jnp.int32, (tm, 1), 0) + i0
    diag = jnp.sum(jnp.where(col_ids == labels, logits, 0.0),
                   axis=-1, keepdims=True)                      # (TM, 1), exact logits[r, i0+r]
    # argmax approximation: correct iff the diagonal attains the row max
    # (identical to argmax==label except on exact float ties).
    correct = (diag == row_max).astype(jnp.float32)             # (TM, 1)

    # ---- text-side cross-entropy: online column exp-sum, scalar running shift ----
    m_old = m_run_ref[...]                                      # (1, 1)
    m_tile = jnp.max(row_max, keepdims=True)                    # (1, 1) slab max
    m_new = jnp.maximum(m_old, m_tile)                          # (1, 1)
    row_corr = jnp.exp(row_max - m_new)                         # (TM, 1), exponents <= 0
    col_l_ref[...] = (col_l_ref[...] * jnp.exp(m_old - m_new)
                      + jnp.sum(p * row_corr, axis=0, keepdims=True))   # (1, N)
    m_run_ref[...] = m_new

    is_gt = gt_tile
    is_ps = 1.0 - gt_tile

    # ---- accumulate scalar stats, lane-coded into one (1, 8) scratch ----
    lane8 = lax.broadcasted_iota(jnp.int32, (1, 8), 1)

    def pack8(vals):
        out = jnp.zeros((1, 8), jnp.float32)
        for k, v in enumerate(vals):
            out = out + jnp.where(lane8 == k, v, 0.0)
        return out

    acc_ref[...] += pack8([
        jnp.sum(row_lse - diag, keepdims=True),     # 0: sum_i (row_lse_i - diag_i)
        jnp.sum(diag, keepdims=True),               # 1: sum_i diag_i
        jnp.sum(correct, keepdims=True),            # 2: # correct (all)
        jnp.sum(correct * is_gt, keepdims=True),    # 3: # correct & gt
        jnp.sum(correct * is_ps, keepdims=True),    # 4: # correct & pseudo
        jnp.sum(is_gt, keepdims=True),              # 5: # gt rows
        jnp.sum(is_ps, keepdims=True),              # 6: # pseudo rows
    ])

    @pl.when(i == n_tiles - 1)
    def _finalize():
        a = acc_ref[...]

        def lane(k):
            return jnp.sum(jnp.where(lane8 == k, a, 0.0), keepdims=True)  # (1, 1)

        sum_img_ce = lane(0)
        sum_diag = lane(1)
        c_all, c_gt, c_ps = lane(2), lane(3), lane(4)
        n_gt, n_ps = lane(5), lane(6)

        # col_lse[c] = m_run + log(col_l[c])  ->  sum over columns
        col_lse_sum = (jnp.sum(jnp.log(col_l_ref[...]), keepdims=True)
                       + jnp.float32(n) * m_run_ref[...])                  # (1, 1)
        inv_n = jnp.float32(1.0 / n)
        loss = 0.5 * inv_n * (sum_img_ce + col_lse_sum - sum_diag)
        acc_all = 100.0 * c_all * inv_n
        acc_gt = jnp.where(n_gt > 0.0, 100.0 * c_gt / jnp.maximum(n_gt, 1.0), 0.0)
        acc_ps = jnp.where(n_ps > 0.0, 100.0 * c_ps / jnp.maximum(n_ps, 1.0), 0.0)

        out_ref[...] = pack8([loss, acc_all, acc_gt, acc_ps, n_gt, n_ps])


def _pick_tile_rows(n, d, itemsize):
    """128-row tiles preferred (v5e-friendly; no MXU loss on v6e/v7x), shrunk so the
    resident txt slab + live (TM,N) f32 temporaries stay within a v7x-safe budget."""
    if n <= 128:
        return n
    budget = 40 << 20                       # conservative live-VMEM budget (v7x 64 MiB)
    resident = n * d * itemsize + 8 * n     # txt slab + (1,N) col_scale / col_l
    for t in (128, 64, 32, 16, 8):
        if n % t:
            continue
        live = resident + 2 * t * d * itemsize + 4 * t * n * 4
        if live <= budget:
            return t
    for t in (8, 16, 32, 64, 128):          # fall back to the smallest legal tile
        if n % t == 0:
            return t
    return n


def _vmem_limit_bytes(n, d, tm, itemsize):
    """Explicit scoped-VMEM request sized from actual residency, capped by physical."""
    resident = 2 * n * d * itemsize + 2 * 4 * n            # txt (pipelined) + col_scale
    streamed = 2 * (tm * d * itemsize + tm * 128 * 4)      # img + gt tiles (double-buf)
    scratch = 4 * n + 64                                   # col_l + small scalars
    slabs = 5 * tm * n * 4                                 # live (TM,N) f32 temporaries
    need = int((resident + streamed + scratch + slabs) * 1.25) + (2 << 20)
    try:
        phys = int(pltpu.get_tpu_info().vmem_capacity_bytes)
    except Exception:
        phys = 64 << 20                                    # v7x-safe fallback
    return max(min(need, int(phys * 0.9)), 32 << 20)


def ssl_clip_loss(image_embed, text_embed, logit_scale, gt_indicators,
                  logit_scale_pseudo_param, tile_rows=None, use_bf16_mxu=False):
    """world_size == 1 forward of SSLCLIPLoss as one tiled Pallas kernel."""
    n, d = image_embed.shape
    if use_bf16_mxu:
        # Optional v6e/v7x throughput knob: bf16 MXU operands, f32 softmax math.
        image_embed = image_embed.astype(jnp.bfloat16)
        text_embed = text_embed.astype(jnp.bfloat16)
    itemsize = jnp.dtype(image_embed.dtype).itemsize
    tm = tile_rows if tile_rows is not None else _pick_tile_rows(n, d, itemsize)
    assert n % tm == 0 and (tm == n or tm % 8 == 0), "bad row-tile size"

    gt = gt_indicators.astype(jnp.float32).reshape(n, 1)
    sqrt_ls = jnp.sqrt(jnp.asarray(logit_scale, jnp.float32))
    sqrt_lsp = jnp.sqrt(jnp.exp(jnp.asarray(logit_scale_pseudo_param, jnp.float32)))
    scales = jnp.stack([sqrt_ls, sqrt_lsp])                       # (2,) SMEM
    # Lane-dense resident column-scale row vector (rank-1 factor sqrt(s_j)).
    col_scale = jnp.where(gt.reshape(1, n) == 1.0, sqrt_ls, sqrt_lsp)   # (1, N) f32

    cost = pl.CostEstimate(
        flops=int(2 * n * n * d),
        transcendentals=int(n * n + 4 * n),
        bytes_accessed=int(2 * n * d * itemsize + 8 * n + 8 * 4),
    )

    stats = pl.pallas_call(
        _ssl_clip_loss_kernel,
        out_shape=jax.ShapeDtypeStruct((1, 8), jnp.float32),
        grid_spec=pltpu.PrefetchScalarGridSpec(
            num_scalar_prefetch=0,
            grid=(n // tm,),
            in_specs=[
                pl.BlockSpec(memory_space=pltpu.MemorySpace.SMEM),   # scales (2,)
                pl.BlockSpec((1, n), lambda i: (0, 0)),              # col_scale, resident
                pl.BlockSpec((tm, 1), lambda i: (i, 0)),             # gt row tile
                pl.BlockSpec((tm, d), lambda i: (i, 0)),             # img row tile
                pl.BlockSpec((n, d), lambda i: (0, 0)),              # txt, resident
            ],
            out_specs=pl.BlockSpec((1, 8), lambda i: (0, 0)),
            scratch_shapes=[
                pltpu.VMEM((1, n), jnp.float32),   # online column exp-sum
                pltpu.VMEM((1, 1), jnp.float32),   # running scalar max shift
                pltpu.VMEM((1, 8), jnp.float32),   # packed scalar accumulators
            ],
        ),
        compiler_params=pltpu.CompilerParams(
            dimension_semantics=("arbitrary",),        # row axis carries col-LSE state
            vmem_limit_bytes=_vmem_limit_bytes(n, d, tm, itemsize),
        ),
        cost_estimate=cost,
    )(scales, col_scale, gt, image_embed, text_embed)

    loss = stats[0, 0]
    return {
        'loss': loss,
        'clip_loss': loss,
        'num_gt': stats[0, 4:5].astype(jnp.int32),
        'num_pseudo': stats[0, 5:6].astype(jnp.int32),
        'clip_acc': stats[0, 1],
        'clip_acc_gt': stats[0, 2],
        'clip_acc_pseudo': stats[0, 3],
    }


def _reference(image_embed, text_embed, logit_scale, gt, pseudo_param):
    """Pure-JAX reference of the PyTorch forward (world_size == 1)."""
    n = gt.shape[0]
    ls_pseudo = jnp.exp(pseudo_param)
    mask = gt[:, None] + gt[None, :]
    scale_mat = jnp.where(mask == 0, ls_pseudo,
                          jnp.where(mask == 1, jnp.sqrt(ls_pseudo * logit_scale),
                                    logit_scale))
    logits_i = scale_mat * (image_embed @ text_embed.T)
    logits_t = scale_mat * (text_embed @ image_embed.T)
    labels = jnp.arange(n)

    def ce(lg):
        return jnp.mean(jax.nn.logsumexp(lg, axis=-1) - lg[jnp.arange(n), labels])

    loss = 0.5 * (ce(logits_i) + ce(logits_t))
    pred = jnp.argmax(logits_i, axis=-1)
    correct = (pred == labels)
    acc = 100.0 * jnp.sum(correct) / n
    acc_gt = 100.0 * jnp.sum(correct & (gt == 1)) / jnp.sum(gt == 1)
    acc_pseudo = 100.0 * jnp.sum(correct & (gt == 0)) / jnp.sum(gt == 0)
    return loss, acc, acc_gt, acc_pseudo


if __name__ == "__main__":
    scale_init = 0.08
    logit_scale_pseudo_param = jnp.float32(np.log(1.0 / scale_init))  # nn.Parameter init
    logit_scale = jnp.float32(1.0 / 0.07)                             # outputs['logit_scale']
    key = jax.random.PRNGKey(0)

    def run_case(n, d, case_id, tile_rows=None):
        k_img, k_txt, k_gt = jax.random.split(jax.random.fold_in(key, case_id), 3)
        img = jax.random.normal(k_img, (n, d), dtype=jnp.float32)
        txt = jax.random.normal(k_txt, (n, d), dtype=jnp.float32)
        img = img / jnp.linalg.norm(img, axis=-1, keepdims=True)
        txt = txt / jnp.linalg.norm(txt, axis=-1, keepdims=True)
        gt = (jax.random.uniform(k_gt, (n,)) > 0.5).astype(jnp.int32)
        gt = gt.at[0].set(1).at[1].set(0)   # guarantee both groups are non-empty

        out = ssl_clip_loss(img, txt, logit_scale, gt, logit_scale_pseudo_param,
                            tile_rows=tile_rows)
        out = jax.tree_util.tree_map(jax.block_until_ready, out)

        ref_loss, ref_acc, ref_acc_gt, ref_acc_ps = _reference(
            img, txt, logit_scale, gt.astype(jnp.float32), logit_scale_pseudo_param)

        np.testing.assert_allclose(np.asarray(out['loss']), np.asarray(ref_loss),
                                   rtol=1e-3, atol=1e-3)
        np.testing.assert_allclose(np.asarray(out['clip_acc']), np.asarray(ref_acc),
                                   rtol=1e-3, atol=1e-3)
        np.testing.assert_allclose(np.asarray(out['clip_acc_gt']),
                                   np.asarray(ref_acc_gt), rtol=1e-3, atol=1e-3)
        np.testing.assert_allclose(np.asarray(out['clip_acc_pseudo']),
                                   np.asarray(ref_acc_ps), rtol=1e-3, atol=1e-3)
        assert int(out['num_gt'][0]) == int(jnp.sum(gt == 1))
        assert int(out['num_pseudo'][0]) == int(jnp.sum(gt == 0))

    run_case(8, 32, 0)                    # single tile, grid = (1,)
    run_case(32, 32, 1, tile_rows=8)      # multi-tile: exercises the online column path
    run_case(64, 32, 2, tile_rows=16)     # multi-tile, larger tile
    print("KERNEL_OK")
</pallas_src>

<mosaic_0001>
module attributes {stable_mosaic.version = 11 : i64} {
  func.func @_ssl_clip_loss_kernel(%arg0: i32, %arg1: memref<2xf32, #tpu.memory_space<smem>>, %arg2: memref<1x8xf32, #tpu.memory_space<vmem>>, %arg3: memref<8x1xf32, #tpu.memory_space<vmem>>, %arg4: memref<8x32xf32, #tpu.memory_space<vmem>>, %arg5: memref<8x32xf32, #tpu.memory_space<vmem>>, %arg6: memref<1x8xf32, #tpu.memory_space<vmem>>, %arg7: memref<1x8xf32, #tpu.memory_space<vmem>>, %arg8: memref<1x1xf32, #tpu.memory_space<vmem>>, %arg9: memref<1x8xf32, #tpu.memory_space<vmem>>) attributes {dimension_semantics = [#tpu.dimension_semantics<arbitrary>], iteration_bounds = array<i64: 1>, scalar_prefetch = 0 : i64, scratch_operands = 3 : i64, tpu.core_type = #tpu.core_type<tc>, window_params = [{transform_indices = @transform_0, window_bounds = array<i64: 2>}, {pipeline_mode = #tpu.pipeline_mode<synchronous>, transform_indices = @transform_1, window_bounds = array<i64: 1, 8>}, {transform_indices = @transform_2, window_bounds = array<i64: 8, 1>}, {transform_indices = @transform_3, window_bounds = array<i64: 8, 32>}, {pipeline_mode = #tpu.pipeline_mode<synchronous>, transform_indices = @transform_4, window_bounds = array<i64: 8, 32>}, {pipeline_mode = #tpu.pipeline_mode<synchronous>, transform_indices = @transform_5, window_bounds = array<i64: 1, 8>}]} {
    %c8_i32 = arith.constant 8 : i32
    %0 = arith.muli %arg0, %c8_i32 : i32
    %1 = tpu.assume_multiple %0, 8 : i32
    %c0 = arith.constant 0 : index
    %2 = memref.load %arg1[%c0] : memref<2xf32, #tpu.memory_space<smem>>
    %c1 = arith.constant 1 : index
    %3 = memref.load %arg1[%c1] : memref<2xf32, #tpu.memory_space<smem>>
    %c0_i32 = arith.constant 0 : i32
    %4 = arith.cmpi eq, %arg0, %c0_i32 : i32
    %5 = arith.extui %4 : i1 to i32
    %c0_i32_0 = arith.constant 0 : i32
    %6 = arith.cmpi ne, %5, %c0_i32_0 : i32
    scf.if %6 {
      %cst_47 = arith.constant 0.000000e+00 : f32
      %162 = vector.broadcast %cst_47 : f32 to vector<1x8xf32>
      %c0_48 = arith.constant 0 : index
      %c0_49 = arith.constant 0 : index
      %163 = vector.load %arg7[%c0_48, %c0_49] : memref<1x8xf32, #tpu.memory_space<vmem>>, vector<1x8xf32>
      tpu.vector_store %arg7[%c0_48, %c0_49], %162 {strides = array<i32>} : memref<1x8xf32, #tpu.memory_space<vmem>>, vector<1x8xf32>,
      %cst_50 = arith.constant 0xFF800000 : f32
      %164 = vector.broadcast %cst_50 : f32 to vector<1x1xf32>
      %c0_51 = arith.constant 0 : index
      %c0_52 = arith.constant 0 : index
      %165 = vector.load %arg8[%c0_51, %c0_52] : memref<1x1xf32, #tpu.memory_space<vmem>>, vector<1x1xf32>
      tpu.vector_store %arg8[%c0_51, %c0_52], %164 {strides = array<i32>} : memref<1x1xf32, #tpu.memory_space<vmem>>, vector<1x1xf32>,
      %cst_53 = arith.constant 0.000000e+00 : f32
      %166 = vector.broadcast %cst_53 : f32 to vector<1x8xf32>
      %c0_54 = arith.constant 0 : index
      %c0_55 = arith.constant 0 : index
      %167 = vector.load %arg9[%c0_54, %c0_55] : memref<1x8xf32, #tpu.memory_space<vmem>>, vector<1x8xf32>
      tpu.vector_store %arg9[%c0_54, %c0_55], %166 {strides = array<i32>} : memref<1x8xf32, #tpu.memory_space<vmem>>, vector<1x8xf32>,
      %cst_56 = arith.constant 0.000000e+00 : f32
      %168 = vector.broadcast %cst_56 : f32 to vector<1x8xf32>
      %c0_57 = arith.constant 0 : index
      %c0_58 = arith.constant 0 : index
      %169 = vector.load %arg6[%c0_57, %c0_58] : memref<1x8xf32, #tpu.memory_space<vmem>>, vector<1x8xf32>
      tpu.vector_store %arg6[%c0_57, %c0_58], %168 {strides = array<i32>} : memref<1x8xf32, #tpu.memory_space<vmem>>, vector<1x8xf32>,
    } else {
    }
    %c0_1 = arith.constant 0 : index
    %c0_2 = arith.constant 0 : index
    %7 = vector.load %arg3[%c0_1, %c0_2] : memref<8x1xf32, #tpu.memory_space<vmem>>, vector<8x1xf32>
    %cst = arith.constant 1.000000e+00 : f32
    %8 = vector.broadcast %cst : f32 to vector<8x1xf32>
    %9 = arith.cmpf oeq, %7, %8 : vector<8x1xf32>
    %10 = vector.broadcast %2 : f32 to vector<8x1xf32>
    %11 = vector.broadcast %3 : f32 to vector<8x1xf32>
    %12 = arith.select %9, %10, %11 : vector<8x1xi1>, vector<8x1xf32>
    %c0_3 = arith.constant 0 : index
    %c0_4 = arith.constant 0 : index
    %13 = vector.load %arg4[%c0_3, %c0_4] : memref<8x32xf32, #tpu.memory_space<vmem>>, vector<8x32xf32>
    %14 = vector.broadcast %12 : vector<8x1xf32> to vector<8x32xf32>
    %15 = arith.mulf %13, %14 : vector<8x32xf32>
    %c0_5 = arith.constant 0 : index
    %c0_6 = arith.constant 0 : index
    %16 = vector.load %arg5[%c0_5, %c0_6] : memref<8x32xf32, #tpu.memory_space<vmem>>, vector<8x32xf32>
    %cst_7 = arith.constant dense<0.000000e+00> : vector<8x8xf32>
    %17 = tpu.matmul %15, %16, %cst_7 {dimension_numbers = #tpu.dot_dimension_numbers<[1], [1], [0], [0], [0, 0, 1, 0], [], []>} : vector<8x32xf32>, vector<8x32xf32>, vector<8x8xf32> -> vector<8x8xf32>
    %c0_8 = arith.constant 0 : index
    %c0_9 = arith.constant 0 : index
    %18 = vector.load %arg2[%c0_8, %c0_9] : memref<1x8xf32, #tpu.memory_space<vmem>>, vector<1x8xf32>
    %19 = vector.broadcast %18 : vector<1x8xf32> to vector<8x8xf32>
    %20 = arith.mulf %17, %19 : vector<8x8xf32>
    %cst_10 = arith.constant dense<0xFF800000> : vector<8xf32>
    %21 = vector.multi_reduction <maximumf>, %20, %cst_10 [1] : vector<8x8xf32> to vector<8xf32>
    %22 = vector.shape_cast %21 : vector<8xf32> to vector<8x1xf32>
    %23 = vector.broadcast %22 : vector<8x1xf32> to vector<8x8xf32>
    %24 = arith.subf %20, %23 : vector<8x8xf32>
    %25 = math.exp %24 : vector<8x8xf32>
    %cst_11 = arith.constant dense<0.000000e+00> : vector<8xf32>
    %26 = vector.multi_reduction <add>, %25, %cst_11 [1] : vector<8x8xf32> to vector<8xf32>
    %27 = vector.shape_cast %26 : vector<8xf32> to vector<8x1xf32>
    %28 = math.log %27 : vector<8x1xf32>
    %29 = arith.addf %28, %22 : vector<8x1xf32>
    %30 = tpu.iota {dimensions = array<i32: 1>} : vector<8x8xi32>
    %31 = tpu.iota {dimensions = array<i32: 0>} : vector<8x1xi32>
    %32 = vector.broadcast %1 : i32 to vector<8x1xi32>
    %33 = arith.addi %31, %32 : vector<8x1xi32>
    %34 = vector.broadcast %33 : vector<8x1xi32> to vector<8x8xi32>
    %35 = arith.cmpi eq, %30, %34 : vector<8x8xi32>
    %cst_12 = arith.constant 0.000000e+00 : f32
    %36 = vector.broadcast %cst_12 : f32 to vector<8x8xf32>
    %37 = arith.select %35, %20, %36 : vector<8x8xi1>, vector<8x8xf32>
    %cst_13 = arith.constant dense<0.000000e+00> : vector<8xf32>
    %38 = vector.multi_reduction <add>, %37, %cst_13 [1] : vector<8x8xf32> to vector<8xf32>
    %39 = vector.shape_cast %38 : vector<8xf32> to vector<8x1xf32>
    %40 = arith.cmpf oeq, %39, %22 : vector<8x1xf32>
    %41 = arith.extui %40 : vector<8x1xi1> to vector<8x1xi32>
    %42 = arith.sitofp %41 : vector<8x1xi32> to vector<8x1xf32>
    %c0_14 = arith.constant 0 : index
    %c0_15 = arith.constant 0 : index
    %43 = vector.load %arg8[%c0_14, %c0_15] : memref<1x1xf32, #tpu.memory_space<vmem>>, vector<1x1xf32>
    %44 = vector.shape_cast %22 : vector<8x1xf32> to vector<1x8x1xf32>
    %cst_16 = arith.constant dense<0xFF800000> : vector<1xf32>
    %45 = vector.multi_reduction <maximumf>, %44, %cst_16 [1, 2] : vector<1x8x1xf32> to vector<1xf32>
    %46 = vector.shape_cast %45 : vector<1xf32> to vector<1x1x1xf32>
    %47 = vector.extract %46[0, 0, 0] : f32 from vector<1x1x1xf32>
    %48 = vector.broadcast %47 : f32 to vector<1x1xf32>
    %49 = arith.maximumf %43, %48 : vector<1x1xf32>
    %50 = vector.broadcast %49 : vector<1x1xf32> to vector<8x1xf32>
    %51 = arith.subf %22, %50 : vector<8x1xf32>
    %52 = math.exp %51 : vector<8x1xf32>
    %c0_17 = arith.constant 0 : index
    %c0_18 = arith.constant 0 : index
    %53 = vector.load %arg7[%c0_17, %c0_18] : memref<1x8xf32, #tpu.memory_space<vmem>>, vector<1x8xf32>
    %54 = arith.subf %43, %49 : vector<1x1xf32>
    %55 = math.exp %54 : vector<1x1xf32>
    %56 = vector.broadcast %55 : vector<1x1xf32> to vector<1x8xf32>
    %57 = arith.mulf %53, %56 : vector<1x8xf32>
    %58 = vector.broadcast %52 : vector<8x1xf32> to vector<8x8xf32>
    %59 = arith.mulf %25, %58 : vector<8x8xf32>
    %cst_19 = arith.constant dense<0.000000e+00> : vector<8xf32>
    %60 = vector.multi_reduction <add>, %59, %cst_19 [0] : vector<8x8xf32> to vector<8xf32>
    %61 = vector.shape_cast %60 : vector<8xf32> to vector<1x8xf32>
    %62 = arith.addf %57, %61 : vector<1x8xf32>
    %c0_20 = arith.constant 0 : index
    %c0_21 = arith.constant 0 : index
    %63 = vector.load %arg7[%c0_20, %c0_21] : memref<1x8xf32, #tpu.memory_space<vmem>>, vector<1x8xf32>
    tpu.vector_store %arg7[%c0_20, %c0_21], %62 {strides = array<i32>} : memref<1x8xf32, #tpu.memory_space<vmem>>, vector<1x8xf32>,
    %c0_22 = arith.constant 0 : index
    %c0_23 = arith.constant 0 : index
    %64 = vector.load %arg8[%c0_22, %c0_23] : memref<1x1xf32, #tpu.memory_space<vmem>>, vector<1x1xf32>
    tpu.vector_store %arg8[%c0_22, %c0_23], %49 {strides = array<i32>} : memref<1x1xf32, #tpu.memory_space<vmem>>, vector<1x1xf32>,
    %cst_24 = arith.constant 1.000000e+00 : f32
    %65 = vector.broadcast %cst_24 : f32 to vector<8x1xf32>
    %66 = arith.subf %65, %7 : vector<8x1xf32>
    %67 = tpu.iota {dimensions = array<i32: 1>} : vector<1x8xi32>
    %c0_25 = arith.constant 0 : index
    %c0_26 = arith.constant 0 : index
    %68 = vector.load %arg9[%c0_25, %c0_26] : memref<1x8xf32, #tpu.memory_space<vmem>>, vector<1x8xf32>
    %69 = arith.subf %29, %39 : vector<8x1xf32>
    %70 = vector.shape_cast %69 : vector<8x1xf32> to vector<1x8x1xf32>
    %cst_27 = arith.constant dense<0.000000e+00> : vector<1xf32>
    %71 = vector.multi_reduction <add>, %70, %cst_27 [1, 2] : vector<1x8x1xf32> to vector<1xf32>
    %72 = vector.shape_cast %71 : vector<1xf32> to vector<1x1x1xf32>
    %73 = vector.extract %72[0, 0, 0] : f32 from vector<1x1x1xf32>
    %74 = vector.broadcast %73 : f32 to vector<1x1xf32>
    %75 = vector.shape_cast %39 : vector<8x1xf32> to vector<1x8x1xf32>
    %cst_28 = arith.constant dense<0.000000e+00> : vector<1xf32>
    %76 = vector.multi_reduction <add>, %75, %cst_28 [1, 2] : vector<1x8x1xf32> to vector<1xf32>
    %77 = vector.shape_cast %76 : vector<1xf32> to vector<1x1x1xf32>
    %78 = vector.extract %77[0, 0, 0] : f32 from vector<1x1x1xf32>
    %79 = vector.broadcast %78 : f32 to vector<1x1xf32>
    %80 = vector.shape_cast %42 : vector<8x1xf32> to vector<1x8x1xf32>
    %cst_29 = arith.constant dense<0.000000e+00> : vector<1xf32>
    %81 = vector.multi_reduction <add>, %80, %cst_29 [1, 2] : vector<1x8x1xf32> to vector<1xf32>
    %82 = vector.shape_cast %81 : vector<1xf32> to vector<1x1x1xf32>
    %83 = vector.extract %82[0, 0, 0] : f32 from vector<1x1x1xf32>
    %84 = vector.broadcast %83 : f32 to vector<1x1xf32>
    %85 = arith.mulf %42, %7 : vector<8x1xf32>
    %86 = vector.shape_cast %85 : vector<8x1xf32> to vector<1x8x1xf32>
    %cst_30 = arith.constant dense<0.000000e+00> : vector<1xf32>
    %87 = vector.multi_reduction <add>, %86, %cst_30 [1, 2] : vector<1x8x1xf32> to vector<1xf32>
    %88 = vector.shape_cast %87 : vector<1xf32> to vector<1x1x1xf32>
    %89 = vector.extract %88[0, 0, 0] : f32 from vector<1x1x1xf32>
    %90 = vector.broadcast %89 : f32 to vector<1x1xf32>
    %91 = arith.mulf %42, %66 : vector<8x1xf32>
    %92 = vector.shape_cast %91 : vector<8x1xf32> to vector<1x8x1xf32>
    %cst_31 = arith.constant dense<0.000000e+00> : vector<1xf32>
    %93 = vector.multi_reduction <add>, %92, %cst_31 [1, 2] : vector<1x8x1xf32> to vector<1xf32>
    %94 = vector.shape_cast %93 : vector<1xf32> to vector<1x1x1xf32>
    %95 = vector.extract %94[0, 0, 0] : f32 from vector<1x1x1xf32>
    %96 = vector.broadcast %95 : f32 to vector<1x1xf32>
    %97 = vector.shape_cast %7 : vector<8x1xf32> to vector<1x8x1xf32>
    %cst_32 = arith.constant dense<0.000000e+00> : vector<1xf32>
    %98 = vector.multi_reduction <add>, %97, %cst_32 [1, 2] : vector<1x8x1xf32> to vector<1xf32>
    %99 = vector.shape_cast %98 : vector<1xf32> to vector<1x1x1xf32>
    %100 = vector.extract %99[0, 0, 0] : f32 from vector<1x1x1xf32>
    %101 = vector.broadcast %100 : f32 to vector<1x1xf32>
    %102 = vector.shape_cast %66 : vector<8x1xf32> to vector<1x8x1xf32>
    %cst_33 = arith.constant dense<0.000000e+00> : vector<1xf32>
    %103 = vector.multi_reduction <add>, %102, %cst_33 [1, 2] : vector<1x8x1xf32> to vector<1xf32>
    %104 = vector.shape_cast %103 : vector<1xf32> to vector<1x1x1xf32>
    %105 = vector.extract %104[0, 0, 0] : f32 from vector<1x1x1xf32>
    %106 = vector.broadcast %105 : f32 to vector<1x1xf32>
    %cst_34 = arith.constant 0.000000e+00 : f32
    %107 = vector.broadcast %cst_34 : f32 to vector<1x8xf32>
    %c0_i32_35 = arith.constant 0 : i32
    %108 = vector.broadcast %c0_i32_35 : i32 to vector<1x8xi32>
    %109 = arith.cmpi eq, %67, %108 : vector<1x8xi32>
    %cst_36 = arith.constant 0.000000e+00 : f32
    %110 = vector.shape_cast %74 : vector<1x1xf32> to vector<1x1xf32>
    %111 = vector.broadcast %110 : vector<1x1xf32> to vector<1x8xf32>
    %112 = vector.broadcast %cst_36 : f32 to vector<1x8xf32>
    %113 = arith.select %109, %111, %112 : vector<1x8xi1>, vector<1x8xf32>
    %114 = arith.addf %107, %113 : vector<1x8xf32>
    %c1_i32 = arith.constant 1 : i32
    %115 = vector.broadcast %c1_i32 : i32 to vector<1x8xi32>
    %116 = arith.cmpi eq, %67, %115 : vector<1x8xi32>
    %cst_37 = arith.constant 0.000000e+00 : f32
    %117 = vector.shape_cast %79 : vector<1x1xf32> to vector<1x1xf32>
    %118 = vector.broadcast %117 : vector<1x1xf32> to vector<1x8xf32>
    %119 = vector.broadcast %cst_37 : f32 to vector<1x8xf32>
    %120 = arith.select %116, %118, %119 : vector<1x8xi1>, vector<1x8xf32>
    %121 = arith.addf %114, %120 : vector<1x8xf32>
    %c2_i32 = arith.constant 2 : i32
    %122 = vector.broadcast %c2_i32 : i32 to vector<1x8xi32>
    %123 = arith.cmpi eq, %67, %122 : vector<1x8xi32>
    %cst_38 = arith.constant 0.000000e+00 : f32
    %124 = vector.shape_cast %84 : vector<1x1xf32> to vector<1x1xf32>
    %125 = vector.broadcast %124 : vector<1x1xf32> to vector<1x8xf32>
    %126 = vector.broadcast %cst_38 : f32 to vector<1x8xf32>
    %127 = arith.select %123, %125, %126 : vector<1x8xi1>, vector<1x8xf32>
    %128 = arith.addf %121, %127 : vector<1x8xf32>
    %c3_i32 = arith.constant 3 : i32
    %129 = vector.broadcast %c3_i32 : i32 to vector<1x8xi32>
    %130 = arith.cmpi eq, %67, %129 : vector<1x8xi32>
    %cst_39 = arith.constant 0.000000e+00 : f32
    %131 = vector.shape_cast %90 : vector<1x1xf32> to vector<1x1xf32>
    %132 = vector.broadcast %131 : vector<1x1xf32> to vector<1x8xf32>
    %133 = vector.broadcast %cst_39 : f32 to vector<1x8xf32>
    %134 = arith.select %130, %132, %133 : vector<1x8xi1>, vector<1x8xf32>
    %135 = arith.addf %128, %134 : vector<1x8xf32>
    %c4_i32 = arith.constant 4 : i32
    %136 = vector.broadcast %c4_i32 : i32 to vector<1x8xi32>
    %137 = arith.cmpi eq, %67, %136 : vector<1x8xi32>
    %cst_40 = arith.constant 0.000000e+00 : f32
    %138 = vector.shape_cast %96 : vector<1x1xf32> to vector<1x1xf32>
    %139 = vector.broadcast %138 : vector<1x1xf32> to vector<1x8xf32>
    %140 = vector.broadcast %cst_40 : f32 to vector<1x8xf32>
    %141 = arith.select %137, %139, %140 : vector<1x8xi1>, vector<1x8xf32>
    %142 = arith.addf %135, %141 : vector<1x8xf32>
    %c5_i32 = arith.constant 5 : i32
    %143 = vector.broadcast %c5_i32 : i32 to vector<1x8xi32>
    %144 = arith.cmpi eq, %67, %143 : vector<1x8xi32>
    %cst_41 = arith.constant 0.000000e+00 : f32
    %145 = vector.shape_cast %101 : vector<1x1xf32> to vector<1x1xf32>
    %146 = vector.broadcast %145 : vector<1x1xf32> to vector<1x8xf32>
    %147 = vector.broadcast %cst_41 : f32 to vector<1x8xf32>
    %148 = arith.select %144, %146, %147 : vector<1x8xi1>, vector<1x8xf32>
    %149 = arith.addf %142, %148 : vector<1x8xf32>
    %c6_i32 = arith.constant 6 : i32
    %150 = vector.broadcast %c6_i32 : i32 to vector<1x8xi32>
    %151 = arith.cmpi eq, %67, %150 : vector<1x8xi32>
    %cst_42 = arith.constant 0.000000e+00 : f32
    %152 = vector.shape_cast %106 : vector<1x1xf32> to vector<1x1xf32>
    %153 = vector.broadcast %152 : vector<1x1xf32> to vector<1x8xf32>
    %154 = vector.broadcast %cst_42 : f32 to vector<1x8xf32>
    %155 = arith.select %151, %153, %154 : vector<1x8xi1>, vector<1x8xf32>
    %156 = arith.addf %149, %155 : vector<1x8xf32>
    %157 = arith.addf %68, %156 : vector<1x8xf32>
    %c0_43 = arith.constant 0 : index
    %c0_44 = arith.constant 0 : index
    %158 = vector.load %arg9[%c0_43, %c0_44] : memref<1x8xf32, #tpu.memory_space<vmem>>, vector<1x8xf32>
    tpu.vector_store %arg9[%c0_43, %c0_44], %157 {strides = array<i32>} : memref<1x8xf32, #tpu.memory_space<vmem>>, vector<1x8xf32>,
    %c0_i32_45 = arith.constant 0 : i32
    %159 = arith.cmpi eq, %arg0, %c0_i32_45 : i32
    %160 = arith.extui %159 : i1 to i32
    %c0_i32_46 = arith.constant 0 : i32
    %161 = arith.cmpi ne, %160, %c0_i32_46 : i32
    scf.if %161 {
      %c0_47 = arith.constant 0 : index
      %c0_48 = arith.constant 0 : index
      %162 = vector.load %arg9[%c0_47, %c0_48] : memref<1x8xf32, #tpu.memory_space<vmem>>, vector<1x8xf32>
      %c0_i32_49 = arith.constant 0 : i32
      %163 = vector.broadcast %c0_i32_49 : i32 to vector<1x8xi32>
      %164 = arith.cmpi eq, %67, %163 : vector<1x8xi32>
      %cst_50 = arith.constant 0.000000e+00 : f32
      %165 = vector.broadcast %cst_50 : f32 to vector<1x8xf32>
      %166 = arith.select %164, %162, %165 : vector<1x8xi1>, vector<1x8xf32>
      %167 = vector.shape_cast %166 : vector<1x8xf32> to vector<1x1x8xf32>
      %cst_51 = arith.constant dense<0.000000e+00> : vector<1xf32>
      %168 = vector.multi_reduction <add>, %167, %cst_51 [1, 2] : vector<1x1x8xf32> to vector<1xf32>
      %169 = vector.shape_cast %168 : vector<1xf32> to vector<1x1x1xf32>
      %170 = vector.extract %169[0, 0, 0] : f32 from vector<1x1x1xf32>
      %171 = vector.broadcast %170 : f32 to vector<1x1xf32>
      %c1_i32_52 = arith.constant 1 : i32
      %172 = vector.broadcast %c1_i32_52 : i32 to vector<1x8xi32>
      %173 = arith.cmpi eq, %67, %172 : vector<1x8xi32>
      %cst_53 = arith.constant 0.000000e+00 : f32
      %174 = vector.broadcast %cst_53 : f32 to vector<1x8xf32>
      %175 = arith.select %173, %162, %174 : vector<1x8xi1>, vector<1x8xf32>
      %176 = vector.shape_cast %175 : vector<1x8xf32> to vector<1x1x8xf32>
      %cst_54 = arith.constant dense<0.000000e+00> : vector<1xf32>
      %177 = vector.multi_reduction <add>, %176, %cst_54 [1, 2] : vector<1x1x8xf32> to vector<1xf32>
      %178 = vector.shape_cast %177 : vector<1xf32> to vector<1x1x1xf32>
      %179 = vector.extract %178[0, 0, 0] : f32 from vector<1x1x1xf32>
      %180 = vector.broadcast %179 : f32 to vector<1x1xf32>
      %c2_i32_55 = arith.constant 2 : i32
      %181 = vector.broadcast %c2_i32_55 : i32 to vector<1x8xi32>
      %182 = arith.cmpi eq, %67, %181 : vector<1x8xi32>
      %cst_56 = arith.constant 0.000000e+00 : f32
      %183 = vector.broadcast %cst_56 : f32 to vector<1x8xf32>
      %184 = arith.select %182, %162, %183 : vector<1x8xi1>, vector<1x8xf32>
      %185 = vector.shape_cast %184 : vector<1x8xf32> to vector<1x1x8xf32>
      %cst_57 = arith.constant dense<0.000000e+00> : vector<1xf32>
      %186 = vector.multi_reduction <add>, %185, %cst_57 [1, 2] : vector<1x1x8xf32> to vector<1xf32>
      %187 = vector.shape_cast %186 : vector<1xf32> to vector<1x1x1xf32>
      %188 = vector.extract %187[0, 0, 0] : f32 from vector<1x1x1xf32>
      %189 = vector.broadcast %188 : f32 to vector<1x1xf32>
      %c3_i32_58 = arith.constant 3 : i32
      %190 = vector.broadcast %c3_i32_58 : i32 to vector<1x8xi32>
      %191 = arith.cmpi eq, %67, %190 : vector<1x8xi32>
      %cst_59 = arith.constant 0.000000e+00 : f32
      %192 = vector.broadcast %cst_59 : f32 to vector<1x8xf32>
      %193 = arith.select %191, %162, %192 : vector<1x8xi1>, vector<1x8xf32>
      %194 = vector.shape_cast %193 : vector<1x8xf32> to vector<1x1x8xf32>
      %cst_60 = arith.constant dense<0.000000e+00> : vector<1xf32>
      %195 = vector.multi_reduction <add>, %194, %cst_60 [1, 2] : vector<1x1x8xf32> to vector<1xf32>
      %196 = vector.shape_cast %195 : vector<1xf32> to vector<1x1x1xf32>
      %197 = vector.extract %196[0, 0, 0] : f32 from vector<1x1x1xf32>
      %198 = vector.broadcast %197 : f32 to vector<1x1xf32>
      %c4_i32_61 = arith.constant 4 : i32
      %199 = vector.broadcast %c4_i32_61 : i32 to vector<1x8xi32>
      %200 = arith.cmpi eq, %67, %199 : vector<1x8xi32>
      %cst_62 = arith.constant 0.000000e+00 : f32
      %201 = vector.broadcast %cst_62 : f32 to vector<1x8xf32>
      %202 = arith.select %200, %162, %201 : vector<1x8xi1>, vector<1x8xf32>
      %203 = vector.shape_cast %202 : vector<1x8xf32> to vector<1x1x8xf32>
      %cst_63 = arith.constant dense<0.000000e+00> : vector<1xf32>
      %204 = vector.multi_reduction <add>, %203, %cst_63 [1, 2] : vector<1x1x8xf32> to vector<1xf32>
      %205 = vector.shape_cast %204 : vector<1xf32> to vector<1x1x1xf32>
      %206 = vector.extract %205[0, 0, 0] : f32 from vector<1x1x1xf32>
      %207 = vector.broadcast %206 : f32 to vector<1x1xf32>
      %c5_i32_64 = arith.constant 5 : i32
      %208 = vector.broadcast %c5_i32_64 : i32 to vector<1x8xi32>
      %209 = arith.cmpi eq, %67, %208 : vector<1x8xi32>
      %cst_65 = arith.constant 0.000000e+00 : f32
      %210 = vector.broadcast %cst_65 : f32 to vector<1x8xf32>
      %211 = arith.select %209, %162, %210 : vector<1x8xi1>, vector<1x8xf32>
      %212 = vector.shape_cast %211 : vector<1x8xf32> to vector<1x1x8xf32>
      %cst_66 = arith.constant dense<0.000000e+00> : vector<1xf32>
      %213 = vector.multi_reduction <add>, %212, %cst_66 [1, 2] : vector<1x1x8xf32> to vector<1xf32>
      %214 = vector.shape_cast %213 : vector<1xf32> to vector<1x1x1xf32>
      %215 = vector.extract %214[0, 0, 0] : f32 from vector<1x1x1xf32>
      %216 = vector.broadcast %215 : f32 to vector<1x1xf32>
      %c6_i32_67 = arith.constant 6 : i32
      %217 = vector.broadcast %c6_i32_67 : i32 to vector<1x8xi32>
      %218 = arith.cmpi eq, %67, %217 : vector<1x8xi32>
      %cst_68 = arith.constant 0.000000e+00 : f32
      %219 = vector.broadcast %cst_68 : f32 to vector<1x8xf32>
      %220 = arith.select %218, %162, %219 : vector<1x8xi1>, vector<1x8xf32>
      %221 = vector.shape_cast %220 : vector<1x8xf32> to vector<1x1x8xf32>
      %cst_69 = arith.constant dense<0.000000e+00> : vector<1xf32>
      %222 = vector.multi_reduction <add>, %221, %cst_69 [1, 2] : vector<1x1x8xf32> to vector<1xf32>
      %223 = vector.shape_cast %222 : vector<1xf32> to vector<1x1x1xf32>
      %224 = vector.extract %223[0, 0, 0] : f32 from vector<1x1x1xf32>
      %225 = vector.broadcast %224 : f32 to vector<1x1xf32>
      %c0_70 = arith.constant 0 : index
      %c0_71 = arith.constant 0 : index
      %226 = vector.load %arg7[%c0_70, %c0_71] : memref<1x8xf32, #tpu.memory_space<vmem>>, vector<1x8xf32>
      %227 = math.log %226 : vector<1x8xf32>
      %228 = vector.shape_cast %227 : vector<1x8xf32> to vector<1x1x8xf32>
      %cst_72 = arith.constant dense<0.000000e+00> : vector<1xf32>
      %229 = vector.multi_reduction <add>, %228, %cst_72 [1, 2] : vector<1x1x8xf32> to vector<1xf32>
      %230 = vector.shape_cast %229 : vector<1xf32> to vector<1x1x1xf32>
      %231 = vector.extract %230[0, 0, 0] : f32 from vector<1x1x1xf32>
      %232 = vector.broadcast %231 : f32 to vector<1x1xf32>
      %c0_73 = arith.constant 0 : index
      %c0_74 = arith.constant 0 : index
      %233 = vector.load %arg8[%c0_73, %c0_74] : memref<1x1xf32, #tpu.memory_space<vmem>>, vector<1x1xf32>
      %cst_75 = arith.constant 8.000000e+00 : f32
      %234 = vector.broadcast %cst_75 : f32 to vector<1x1xf32>
      %235 = arith.mulf %234, %233 : vector<1x1xf32>
      %236 = arith.addf %232, %235 : vector<1x1xf32>
      %cst_76 = arith.constant 5.000000e-01 : f32
      %cst_77 = arith.constant 1.250000e-01 : f32
      %237 = arith.mulf %cst_76, %cst_77 : f32
      %238 = arith.addf %171, %236 : vector<1x1xf32>
      %239 = arith.subf %238, %180 : vector<1x1xf32>
      %240 = vector.broadcast %237 : f32 to vector<1x1xf32>
      %241 = arith.mulf %240, %239 : vector<1x1xf32>
      %cst_78 = arith.constant 1.000000e+02 : f32
      %242 = vector.broadcast %cst_78 : f32 to vector<1x1xf32>
      %243 = arith.mulf %242, %189 : vector<1x1xf32>
      %cst_79 = arith.constant 1.250000e-01 : f32
      %244 = vector.broadcast %cst_79 : f32 to vector<1x1xf32>
      %245 = arith.mulf %243, %244 : vector<1x1xf32>
      %cst_80 = arith.constant 0.000000e+00 : f32
      %246 = vector.broadcast %cst_80 : f32 to vector<1x1xf32>
      %247 = arith.cmpf ogt, %216, %246 : vector<1x1xf32>
      %cst_81 = arith.constant 1.000000e+02 : f32
      %248 = vector.broadcast %cst_81 : f32 to vector<1x1xf32>
      %249 = arith.mulf %248, %198 : vector<1x1xf32>
      %cst_82 = arith.constant 1.000000e+00 : f32
      %250 = vector.broadcast %cst_82 : f32 to vector<1x1xf32>
      %251 = arith.maximumf %216, %250 : vector<1x1xf32>
      %252 = arith.divf %249, %251 : vector<1x1xf32>
      %cst_83 = arith.constant 0.000000e+00 : f32
      %253 = vector.broadcast %cst_83 : f32 to vector<1x1xf32>
      %254 = arith.select %247, %252, %253 : vector<1x1xi1>, vector<1x1xf32>
      %cst_84 = arith.constant 0.000000e+00 : f32
      %255 = vector.broadcast %cst_84 : f32 to vector<1x1xf32>
      %256 = arith.cmpf ogt, %225, %255 : vector<1x1xf32>
      %cst_85 = arith.constant 1.000000e+02 : f32
      %257 = vector.broadcast %cst_85 : f32 to vector<1x1xf32>
      %258 = arith.mulf %257, %207 : vector<1x1xf32>
      %cst_86 = arith.constant 1.000000e+00 : f32
      %259 = vector.broadcast %cst_86 : f32 to vector<1x1xf32>
      %260 = arith.maximumf %225, %259 : vector<1x1xf32>
      %261 = arith.divf %258, %260 : vector<1x1xf32>
      %cst_87 = arith.constant 0.000000e+00 : f32
      %262 = vector.broadcast %cst_87 : f32 to vector<1x1xf32>
      %263 = arith.select %256, %261, %262 : vector<1x1xi1>, vector<1x1xf32>
      %cst_88 = arith.constant 0.000000e+00 : f32
      %264 = vector.broadcast %cst_88 : f32 to vector<1x8xf32>
      %c0_i32_89 = arith.constant 0 : i32
      %265 = vector.broadcast %c0_i32_89 : i32 to vector<1x8xi32>
      %266 = arith.cmpi eq, %67, %265 : vector<1x8xi32>
      %cst_90 = arith.constant 0.000000e+00 : f32
      %267 = vector.shape_cast %241 : vector<1x1xf32> to vector<1x1xf32>
      %268 = vector.broadcast %267 : vector<1x1xf32> to vector<1x8xf32>
      %269 = vector.broadcast %cst_90 : f32 to vector<1x8xf32>
      %270 = arith.select %266, %268, %269 : vector<1x8xi1>, vector<1x8xf32>
      %271 = arith.addf %264, %270 : vector<1x8xf32>
      %c1_i32_91 = arith.constant 1 : i32
      %272 = vector.broadcast %c1_i32_91 : i32 to vector<1x8xi32>
      %273 = arith.cmpi eq, %67, %272 : vector<1x8xi32>
      %cst_92 = arith.constant 0.000000e+00 : f32
      %274 = vector.shape_cast %245 : vector<1x1xf32> to vector<1x1xf32>
      %275 = vector.broadcast %274 : vector<1x1xf32> to vector<1x8xf32>
      %276 = vector.broadcast %cst_92 : f32 to vector<1x8xf32>
      %277 = arith.select %273, %275, %276 : vector<1x8xi1>, vector<1x8xf32>
      %278 = arith.addf %271, %277 : vector<1x8xf32>
      %c2_i32_93 = arith.constant 2 : i32
      %279 = vector.broadcast %c2_i32_93 : i32 to vector<1x8xi32>
      %280 = arith.cmpi eq, %67, %279 : vector<1x8xi32>
      %cst_94 = arith.constant 0.000000e+00 : f32
      %281 = vector.shape_cast %254 : vector<1x1xf32> to vector<1x1xf32>
      %282 = vector.broadcast %281 : vector<1x1xf32> to vector<1x8xf32>
      %283 = vector.broadcast %cst_94 : f32 to vector<1x8xf32>
      %284 = arith.select %280, %282, %283 : vector<1x8xi1>, vector<1x8xf32>
      %285 = arith.addf %278, %284 : vector<1x8xf32>
      %c3_i32_95 = arith.constant 3 : i32
      %286 = vector.broadcast %c3_i32_95 : i32 to vector<1x8xi32>
      %287 = arith.cmpi eq, %67, %286 : vector<1x8xi32>
      %cst_96 = arith.constant 0.000000e+00 : f32
      %288 = vector.shape_cast %263 : vector<1x1xf32> to vector<1x1xf32>
      %289 = vector.broadcast %288 : vector<1x1xf32> to vector<1x8xf32>
      %290 = vector.broadcast %cst_96 : f32 to vector<1x8xf32>
      %291 = arith.select %287, %289, %290 : vector<1x8xi1>, vector<1x8xf32>
      %292 = arith.addf %285, %291 : vector<1x8xf32>
      %c4_i32_97 = arith.constant 4 : i32
      %293 = vector.broadcast %c4_i32_97 : i32 to vector<1x8xi32>
      %294 = arith.cmpi eq, %67, %293 : vector<1x8xi32>
      %cst_98 = arith.constant 0.000000e+00 : f32
      %295 = vector.shape_cast %216 : vector<1x1xf32> to vector<1x1xf32>
      %296 = vector.broadcast %295 : vector<1x1xf32> to vector<1x8xf32>
      %297 = vector.broadcast %cst_98 : f32 to vector<1x8xf32>
      %298 = arith.select %294, %296, %297 : vector<1x8xi1>, vector<1x8xf32>
      %299 = arith.addf %292, %298 : vector<1x8xf32>
      %c5_i32_99 = arith.constant 5 : i32
      %300 = vector.broadcast %c5_i32_99 : i32 to vector<1x8xi32>
      %301 = arith.cmpi eq, %67, %300 : vector<1x8xi32>
      %cst_100 = arith.constant 0.000000e+00 : f32
      %302 = vector.shape_cast %225 : vector<1x1xf32> to vector<1x1xf32>
      %303 = vector.broadcast %302 : vector<1x1xf32> to vector<1x8xf32>
      %304 = vector.broadcast %cst_100 : f32 to vector<1x8xf32>
      %305 = arith.select %301, %303, %304 : vector<1x8xi1>, vector<1x8xf32>
      %306 = arith.addf %299, %305 : vector<1x8xf32>
      %c0_101 = arith.constant 0 : index
      %c0_102 = arith.constant 0 : index
      %307 = vector.load %arg6[%c0_101, %c0_102] : memref<1x8xf32, #tpu.memory_space<vmem>>, vector<1x8xf32>
      tpu.vector_store %arg6[%c0_101, %c0_102], %306 {strides = array<i32>} : memref<1x8xf32, #tpu.memory_space<vmem>>, vector<1x8xf32>,
    } else {
    }
    return
  }
  func.func @transform_0(%arg0: i32) -> i32 {
    %c0_i32 = arith.constant 0 : i32
    %c0_i32_0 = arith.constant 0 : i32
    return %c0_i32 : i32
  }
  func.func @transform_1(%arg0: i32) -> (i32, i32) {
    %c0_i32 = arith.constant 0 : i32
    %c0_i32_0 = arith.constant 0 : i32
    %c0_i32_1 = arith.constant 0 : i32
    return %c0_i32, %c0_i32_0 : i32, i32
  }
  func.func @transform_2(%arg0: i32) -> (i32, i32) {
    %c0_i32 = arith.constant 0 : i32
    %c0_i32_0 = arith.constant 0 : i32
    return %arg0, %c0_i32 : i32, i32
  }
  func.func @transform_3(%arg0: i32) -> (i32, i32) {
    %c0_i32 = arith.constant 0 : i32
    %c0_i32_0 = arith.constant 0 : i32
    return %arg0, %c0_i32 : i32, i32
  }
  func.func @transform_4(%arg0: i32) -> (i32, i32) {
    %c0_i32 = arith.constant 0 : i32
    %c0_i32_0 = arith.constant 0 : i32
    %c0_i32_1 = arith.constant 0 : i32
    return %c0_i32, %c0_i32_0 : i32, i32
  }
  func.func @transform_5(%arg0: i32) -> (i32, i32) {
    %c0_i32 = arith.constant 0 : i32
    %c0_i32_0 = arith.constant 0 : i32
    %c0_i32_1 = arith.constant 0 : i32
    return %c0_i32, %c0_i32_0 : i32, i32
  }
}

</mosaic_0001>

<llo_original>
// kernel: tpu_custom_call.1
$region0: #{tpu_custom_call.1}
  #allocation0 [shape = 'u32[]', space=smem, size = 0x4, offset = 0x4, fixed_abs, tag = 'smem constant byte address 0x4 - core index']
  #allocation1 [shape = 'u32[72,128]{1,0:T(1,128)}', space=vmem, size = 0x9000, scoped, tag = 'internal scratch']
  #allocation2 [shape = 'f32[1,8]{1,0:T(1,128)}', space=vmem, size = 0x200, scoped, tag = 'scratch operand']
  #allocation3 [shape = 'f32[1,1]{1,0:T(1,128)}', space=vmem, size = 0x200, scoped, tag = 'scratch operand']
  #allocation4 [shape = 'f32[1,8]{1,0:T(1,128)}', space=vmem, size = 0x200, scoped, tag = 'scratch operand']
  %s0 = inlined_call_operand.vmem [shape: f32[2], index: 0, kind: input, shape index: {}]
  %s1 = inlined_call_operand.vmem [shape: f32[1,8], index: 1, kind: input, shape index: {}]
  %s2 = inlined_call_operand.vmem [shape: f32[8,1], index: 2, kind: input, shape index: {}]
  %s3 = inlined_call_operand.vmem [shape: f32[8,32], index: 3, kind: input, shape index: {}]
  %s4 = inlined_call_operand.hbm [shape: f32[8,32], index: 4, kind: input, shape index: {}]
  %s5 = inlined_call_operand.hbm [shape: f32[1,8], index: 5, kind: output, shape index: {}]
  %s6 = sld [smem:[#allocation0]]
  $region46: #{tpu_custom_call.1} parent=0
    _
  %s8 = ssub.s32 1, %s6
  %s9 = scalar_select 0, %s8, %s6
  $region1: #{tpu_custom_call.1} parent=0
    #allocation5 [shape = 'u8[512]{0}', space=smem, size = 0x200, scoped, tag = 'input window, operand 0, single buffered']
    #allocation6 [shape = 's32[1]{0}', space=sflag, size = 0x4, scoped, tag = 'scoped memory for tpu_custom_call.1']
    #allocation7 [shape = 's32[1]{0}', space=sflag, size = 0x4, scoped, tag = 'scoped memory for tpu_custom_call.1']
    #allocation8 [shape = 's32[1]{0}', space=sflag, size = 0x4, scoped, tag = 'scoped memory for tpu_custom_call.1']
    #allocation9 [shape = 'u8[4096]{0}', space=vmem, size = 0x1000, scoped, tag = 'input window, operand 4, single buffered']
    #allocation10 [shape = 'u8[512]{0}', space=vmem, size = 0x400, scoped, tag = 'output window, operand 0, single buffered']
    %10 = vsyncpa [#allocation8], 0
    %11 = vsyncpa [#allocation6], 0
    %12 = vsyncpa [#allocation7], 0
    // Predicated region
    $region2: #{tpu_custom_call.1} parent=1 // pred_check
      _
    $region3: #{tpu_custom_call.1} parent=1 // pred_check_branch
      %14 = sbr.rel (0) target = $region5
    $region4: #{tpu_custom_call.1} parent=1 // pred_region
      %16 = vsyncadd [#allocation8], 0
      %s18 = sshll.u32 %s0, 4
      %s19 = int_to_ptr.vmem [resolvable:$true] %s18
      %21 = dma.vmem_to_smem %s19, 16, [#allocation5], [#allocation8]
    $region5: #{tpu_custom_call.1} parent=1 // pred_fallthru
      _
    // Predicated region
    $region6: #{tpu_custom_call.1} parent=1 // pred_check
      _
    $region7: #{tpu_custom_call.1} parent=1 // pred_check_branch
      %23 = sbr.rel (0) target = $region9
    $region8: #{tpu_custom_call.1} parent=1 // pred_region
      _
    $region9: #{tpu_custom_call.1} parent=1 // pred_fallthru
      _
    // Predicated region
    $region10: #{tpu_custom_call.1} parent=1 // pred_check
      _
    $region11: #{tpu_custom_call.1} parent=1 // pred_check_branch
      %25 = sbr.rel (0) target = $region13
    $region12: #{tpu_custom_call.1} parent=1 // pred_region
      _
    $region13: #{tpu_custom_call.1} parent=1 // pred_fallthru
      _
    // Predicated region
    $region14: #{tpu_custom_call.1} parent=1 // pred_check
      _
    $region15: #{tpu_custom_call.1} parent=1 // pred_check_branch
      %27 = sbr.rel (0) target = $region17
    $region16: #{tpu_custom_call.1} parent=1 // pred_region
      _
    $region17: #{tpu_custom_call.1} parent=1 // pred_fallthru
      _
    // Predicated region
    $region18: #{tpu_custom_call.1} parent=1 // pred_check
      _
    $region19: #{tpu_custom_call.1} parent=1 // pred_check_branch
      %29 = sbr.rel (0) target = $region21
    $region20: #{tpu_custom_call.1} parent=1 // pred_region
      %31 = vsyncadd [#allocation6], 0
      %s33 = sshll.u32 %s4, 4
      %s34 = int_to_ptr.hbm [resolvable:$true] %s33
      %s35 = sshll.u32 [#allocation9], 4
      %s36 = int_to_ptr.vmem [resolvable:$true] %s35
      %38 = dma.hbm_to_vmem [thread:$0]  %s34, 128, %s36, [#allocation6]
    $region21: #{tpu_custom_call.1} parent=1 // pred_fallthru
      _
    // Predicated region
    $region22: #{tpu_custom_call.1} parent=1 // pred_check
      _
    $region23: #{tpu_custom_call.1} parent=1 // pred_check_branch
      %40 = sbr.rel (0) target = $region25
    $region24: #{tpu_custom_call.1} parent=1 // pred_region
      %42 = dma.done [#allocation8], 16
    $region25: #{tpu_custom_call.1} parent=1 // pred_fallthru
      _
    // Predicated region
    $region26: #{tpu_custom_call.1} parent=1 // pred_check
      _
    $region27: #{tpu_custom_call.1} parent=1 // pred_check_branch
      %44 = sbr.rel (0) target = $region29
    $region28: #{tpu_custom_call.1} parent=1 // pred_region
      %46 = dma.done [#allocation6], 128
    $region29: #{tpu_custom_call.1} parent=1 // pred_fallthru
      _
    %47 = sfence
    %s48 = smul.u32 0, 8
    %s49 = sld [smem:[#allocation5]]
    %s50 = sld [smem:[#allocation5 + $0x1]]
    %p51 = scmp.eq.s32.totalorder 0, 0
    // Predicated region
    $region30: #{tpu_custom_call.1} parent=1 // pred_check
      %p52 = pneg %p51
    $region31: #{tpu_custom_call.1} parent=1 // pred_check_branch
      %54 = sbr.rel (%p52) target = $region33
    $region32: #{tpu_custom_call.1} parent=1 // pred_region
      %vm55 = vcmask 57344
      %56 = vst.msk [vmem:[#allocation2] sm:$0x1] %vm55, 0.0
      %vm57 = vcmask 0
      %58 = vst.msk [vmem:[#allocation3] sm:$0x1] %vm57, -inf
      %59 = vst.msk [vmem:[#allocation4] sm:$0x1] %vm55, 0.0
      %60 = vst.msk [vmem:[#allocation10] sm:$0x1] %vm55, 0.0
    $region33: #{tpu_custom_call.1} parent=1 // pred_fallthru
      _
    %v61 = vld [vmem:[%s2] sm:$0xff]
    %vm62 = vcmp.eq.f32.partialorder %v61, 1.0
    %v63 = vstv %s49
    %v64 = vstv %s50
    %v65 = vsel %vm62, %v63, %v64
    %v66 = vld [vmem:[%s3] sm:$0xff]
    %68 = vset.pattern.permute.xlu0 0
    %69 = vperm.xlu0 %68, %v65
    %v70 = vpop.permute.xlu0 %69
    %v72 = vmul.f32 %v66, %v70
    %v73 = vld [vmem:[#allocation9] sm:$0xff]
    %vm74 = vcmask 261120
    %v76 = vsel %vm74, %v72, 0
    %v79 = vsel %vm74, %v73, 0
    %81 = vmatpush.xpose.msra.mxu0 0.0
    %82 = vmatpush.xpose.msra.mxu0 0.0
    %83 = vmatpush.xpose.msra.mxu0 0.0
    %84 = vmatpush.xpose.msra.mxu0 0.0
    %85 = vmatpush.xpose.msra.mxu0 0.0
    %86 = vmatpush.xpose.msra.mxu0 0.0
    %87 = vmatpush.xpose.msra.mxu0 0.0
    %88 = vmatpush.xpose.msra.mxu0 0.0
    %89 = vmatpush.xpose.msra.mxu0 0.0
    %90 = vmatpush.xpose.msra.mxu0 0.0
    %91 = vmatpush.xpose.msra.mxu0 0.0
    %92 = vmatpush.xpose.msra.mxu0 0.0
    %93 = vmatpush.xpose.msra.mxu0 0.0
    %94 = vmatpush.xpose.msra.mxu0 0.0
    %95 = vmatpush.xpose.msra.mxu0 0.0
    %96 = vmatpush.xpose.msra.mxu0 %v79
    %97 = vmatmul.f32.gmra.mxu0 %v76
    %v98 = vpop.f32.mrf.mxu0
    %v99 = vadd.f32 0.0, %v98
    %100 = vdwg.mxu0
    %v101 = vld [vmem:[%s1] sm:$0x1]
    %v103 = vperm.slane %v101, 0
    %v105 = vmul.f32 %v99, %v103
    %vm106 = vcmask 64512
    %v107 = vsel %vm106, %v105, -inf
    %108 = vmax.xlane.f32.xlu0 %v107
    %v109 = vpop.xlane.xlu0 %108
    %v110 = vsub.f32 %v105, %v109
    %v111 = vmul.f32 %v110, 1.442695
    %v112 = vpow.pop %v111
    %v113 = vsel %vm106, %v112, 0.0
    %114 = vadd.xlane.f32.xlu0 %v113
    %v115 = vpop.xlane.xlu0 %114
    %v116 = vlog2.pop %v115
    %v117 = vmul.f32 %v116, 0.6931472
    %v118 = vadd.f32 %v117, %v109
    %v119 = vlaneseq
    %v120 = vand.u32 %v119, 127
    %v121 = vlaneseq
    %v122 = vshrl.u32 %v121, 7
    %v123 = vstv %s48
    %v124 = vadd.s32 %v122, %v123
    %vm125 = vcmp.eq.s32.totalorder %v120, %v124
    %v126 = vsel %vm125, %v105, 0.0
    %v127 = vsel %vm106, %v126, 0.0
    %128 = vadd.xlane.f32.xlu0 %v127
    %v129 = vpop.xlane.xlu0 %128
    %vm130 = vcmp.eq.f32.partialorder %v129, %v109
    %v131 = vsel %vm130, 1, 0
    %v132 = vcvt.s32.f32 %v131
    %v133 = vld [vmem:[#allocation3] sm:$0x1]
    %v134 = vrot.slane %v109, 4
    %v135 = vmax.f32 %v109, %v134
    %v136 = vrot.slane %v135, 2
    %v137 = vmax.f32 %v135, %v136
    %v138 = vrot.slane %v137, 1
    %v139 = vmax.f32 %v137, %v138
    %s140 = vtos %v139
    %v141 = vstv %s140
    %v142 = vmax.f32 %v133, %v141
    %v144 = vperm.slane %v142, 0
    %v146 = vsub.f32 %v109, %v144
    %v147 = vmul.f32 %v146, 1.442695
    %v148 = vpow.pop %v147
    %v149 = vld [vmem:[#allocation2] sm:$0x1]
    %v150 = vsub.f32 %v133, %v142
    %v151 = vmul.f32 %v150, 1.442695
    %v152 = vpow.pop %v151
    %154 = vset.pattern.permute.xlu0 0
    %155 = vperm.xlu0 %154, %v152
    %v156 = vpop.permute.xlu0 %155
    %v158 = vperm.slane %v156, 0
    %v159 = vmul.f32 %v149, %v158
    %161 = vset.pattern.permute.xlu0 0
    %162 = vperm.xlu0 %161, %v148
    %v163 = vpop.permute.xlu0 %162
    %v165 = vmul.f32 %v112, %v163
    %v166 = vsel %vm106, %v165, 0.0
    %v167 = vrot.slane %v166, 4
    %v168 = vadd.f32 %v166, %v167
    %v169 = vrot.slane %v168, 2
    %v170 = vadd.f32 %v168, %v169
    %v171 = vrot.slane %v170, 1
    %v172 = vadd.f32 %v170, %v171
    %v173 = vadd.f32 %v159, %v172
    %vm174 = vcmask 57344
    %175 = vst.msk [vmem:[#allocation2] sm:$0x1] %vm174, %v173
    %vm176 = vcmask 0
    %177 = vst.msk [vmem:[#allocation3] sm:$0x1] %vm176, %v142
    %v178 = vsub.f32 1.0, %v61
    %v179 = vld [vmem:[#allocation4] sm:$0x1]
    %v180 = vsub.f32 %v118, %v129
    %vm181 = vcmask 7168
    %v182 = vsel %vm181, %v180, 0.0
    %183 = vadd.xlane.f32.xlu0 %v182
    %v184 = vpop.xlane.xlu0 %183
    %v185 = vrot.slane %v184, 4
    %v186 = vadd.f32 %v184, %v185
    %v187 = vrot.slane %v186, 2
    %v188 = vadd.f32 %v186, %v187
    %v189 = vrot.slane %v188, 1
    %v190 = vadd.f32 %v188, %v189
    %s191 = vtos %v190
    %v192 = vsel %vm181, %v129, 0.0
    %193 = vadd.xlane.f32.xlu0 %v192
    %v194 = vpop.xlane.xlu0 %193
    %v195 = vrot.slane %v194, 4
    %v196 = vadd.f32 %v194, %v195
    %v197 = vrot.slane %v196, 2
    %v198 = vadd.f32 %v196, %v197
    %v199 = vrot.slane %v198, 1
    %v200 = vadd.f32 %v198, %v199
    %s201 = vtos %v200
    %v202 = vsel %vm181, %v132, 0.0
    %203 = vadd.xlane.f32.xlu0 %v202
    %v204 = vpop.xlane.xlu0 %203
    %v205 = vrot.slane %v204, 4
    %v206 = vadd.f32 %v204, %v205
    %v207 = vrot.slane %v206, 2
    %v208 = vadd.f32 %v206, %v207
    %v209 = vrot.slane %v208, 1
    %v210 = vadd.f32 %v208, %v209
    %s211 = vtos %v210
    %v212 = vmul.f32 %v132, %v61
    %v213 = vsel %vm181, %v212, 0.0
    %214 = vadd.xlane.f32.xlu0 %v213
    %v215 = vpop.xlane.xlu0 %214
    %v216 = vrot.slane %v215, 4
    %v217 = vadd.f32 %v215, %v216
    %v218 = vrot.slane %v217, 2
    %v219 = vadd.f32 %v217, %v218
    %v220 = vrot.slane %v219, 1
    %v221 = vadd.f32 %v219, %v220
    %s222 = vtos %v221
    %v223 = vmul.f32 %v132, %v178
    %v224 = vsel %vm181, %v223, 0.0
    %225 = vadd.xlane.f32.xlu0 %v224
    %v226 = vpop.xlane.xlu0 %225
    %v227 = vrot.slane %v226, 4
    %v228 = vadd.f32 %v226, %v227
    %v229 = vrot.slane %v228, 2
    %v230 = vadd.f32 %v228, %v229
    %v231 = vrot.slane %v230, 1
    %v232 = vadd.f32 %v230, %v231
    %s233 = vtos %v232
    %v234 = vsel %vm181, %v61, 0.0
    %235 = vadd.xlane.f32.xlu0 %v234
    %v236 = vpop.xlane.xlu0 %235
    %v237 = vrot.slane %v236, 4
    %v238 = vadd.f32 %v236, %v237
    %v239 = vrot.slane %v238, 2
    %v240 = vadd.f32 %v238, %v239
    %v241 = vrot.slane %v240, 1
    %v242 = vadd.f32 %v240, %v241
    %s243 = vtos %v242
    %v244 = vsel %vm181, %v178, 0.0
    %245 = vadd.xlane.f32.xlu0 %v244
    %v246 = vpop.xlane.xlu0 %245
    %v247 = vrot.slane %v246, 4
    %v248 = vadd.f32 %v246, %v247
    %v249 = vrot.slane %v248, 2
    %v250 = vadd.f32 %v248, %v249
    %v251 = vrot.slane %v250, 1
    %v252 = vadd.f32 %v250, %v251
    %s253 = vtos %v252
    %vm254 = vcmp.eq.s32.totalorder %v120, 0
    %v255 = vstv %s191
    %v256 = vsel %vm254, %v255, 0.0
    %v257 = vadd.f32 %v256, 0.0
    %vm258 = vcmp.eq.s32.totalorder %v120, 1
    %v259 = vstv %s201
    %v260 = vsel %vm258, %v259, 0.0
    %v261 = vadd.f32 %v257, %v260
    %vm262 = vcmp.eq.s32.totalorder %v120, 2
    %v263 = vstv %s211
    %v264 = vsel %vm262, %v263, 0.0
    %v265 = vadd.f32 %v261, %v264
    %vm266 = vcmp.eq.s32.totalorder %v120, 3
    %v267 = vstv %s222
    %v268 = vsel %vm266, %v267, 0.0
    %v269 = vadd.f32 %v265, %v268
    %vm270 = vcmp.eq.s32.totalorder %v120, 4
    %v271 = vstv %s233
    %v272 = vsel %vm270, %v271, 0.0
    %v273 = vadd.f32 %v269, %v272
    %vm274 = vcmp.eq.s32.totalorder %v120, 5
    %v275 = vstv %s243
    %v276 = vsel %vm274, %v275, 0.0
    %v277 = vadd.f32 %v273, %v276
    %vm278 = vcmp.eq.s32.totalorder %v120, 6
    %v279 = vstv %s253
    %v280 = vsel %vm278, %v279, 0.0
    %v281 = vadd.f32 %v277, %v280
    %v282 = vadd.f32 %v179, %v281
    %283 = vst.msk [vmem:[#allocation4] sm:$0x1] %vm174, %v282
    // Predicated region
    $region34: #{tpu_custom_call.1} parent=1 // pred_check
      %p284 = pneg %p51
    $region35: #{tpu_custom_call.1} parent=1 // pred_check_branch
      %286 = sbr.rel (%p284) target = $region37
    $region36: #{tpu_custom_call.1} parent=1 // pred_region
      %v287 = vld [vmem:[#allocation4] sm:$0x1]
      %v288 = vsel %vm254, %v287, 0.0
      %v289 = vsel %vm174, %v288, 0.0
      %290 = vadd.xlane.f32.xlu0 %v289
      %v291 = vpop.xlane.xlu0 %290
      %v292 = vrot.slane %v291, 4
      %v293 = vadd.f32 %v291, %v292
      %v294 = vrot.slane %v293, 2
      %v295 = vadd.f32 %v293, %v294
      %v296 = vrot.slane %v295, 1
      %v297 = vadd.f32 %v295, %v296
      %s298 = vtos %v297
      %v299 = vstv %s298
      %v300 = vsel %vm258, %v287, 0.0
      %v301 = vsel %vm174, %v300, 0.0
      %302 = vadd.xlane.f32.xlu0 %v301
      %v303 = vpop.xlane.xlu0 %302
      %v304 = vrot.slane %v303, 4
      %v305 = vadd.f32 %v303, %v304
      %v306 = vrot.slane %v305, 2
      %v307 = vadd.f32 %v305, %v306
      %v308 = vrot.slane %v307, 1
      %v309 = vadd.f32 %v307, %v308
      %s310 = vtos %v309
      %v311 = vstv %s310
      %v312 = vsel %vm262, %v287, 0.0
      %v313 = vsel %vm174, %v312, 0.0
      %314 = vadd.xlane.f32.xlu0 %v313
      %v315 = vpop.xlane.xlu0 %314
      %v316 = vrot.slane %v315, 4
      %v317 = vadd.f32 %v315, %v316
      %v318 = vrot.slane %v317, 2
      %v319 = vadd.f32 %v317, %v318
      %v320 = vrot.slane %v319, 1
      %v321 = vadd.f32 %v319, %v320
      %s322 = vtos %v321
      %v323 = vstv %s322
      %v324 = vsel %vm266, %v287, 0.0
      %v325 = vsel %vm174, %v324, 0.0
      %326 = vadd.xlane.f32.xlu0 %v325
      %v327 = vpop.xlane.xlu0 %326
      %v328 = vrot.slane %v327, 4
      %v329 = vadd.f32 %v327, %v328
      %v330 = vrot.slane %v329, 2
      %v331 = vadd.f32 %v329, %v330
      %v332 = vrot.slane %v331, 1
      %v333 = vadd.f32 %v331, %v332
      %s334 = vtos %v333
      %v335 = vstv %s334
      %v336 = vsel %vm270, %v287, 0.0
      %v337 = vsel %vm174, %v336, 0.0
      %338 = vadd.xlane.f32.xlu0 %v337
      %v339 = vpop.xlane.xlu0 %338
      %v340 = vrot.slane %v339, 4
      %v341 = vadd.f32 %v339, %v340
      %v342 = vrot.slane %v341, 2
      %v343 = vadd.f32 %v341, %v342
      %v344 = vrot.slane %v343, 1
      %v345 = vadd.f32 %v343, %v344
      %s346 = vtos %v345
      %v347 = vstv %s346
      %v348 = vsel %vm274, %v287, 0.0
      %v349 = vsel %vm174, %v348, 0.0
      %350 = vadd.xlane.f32.xlu0 %v349
      %v351 = vpop.xlane.xlu0 %350
      %v352 = vrot.slane %v351, 4
      %v353 = vadd.f32 %v351, %v352
      %v354 = vrot.slane %v353, 2
      %v355 = vadd.f32 %v353, %v354
      %v356 = vrot.slane %v355, 1
      %v357 = vadd.f32 %v355, %v356
      %s358 = vtos %v357
      %v359 = vstv %s358
      %v360 = vsel %vm278, %v287, 0.0
      %v361 = vsel %vm174, %v360, 0.0
      %362 = vadd.xlane.f32.xlu0 %v361
      %v363 = vpop.xlane.xlu0 %362
      %v364 = vrot.slane %v363, 4
      %v365 = vadd.f32 %v363, %v364
      %v366 = vrot.slane %v365, 2
      %v367 = vadd.f32 %v365, %v366
      %v368 = vrot.slane %v367, 1
      %v369 = vadd.f32 %v367, %v368
      %s370 = vtos %v369
      %v371 = vstv %s370
      %v372 = vld [vmem:[#allocation2] sm:$0x1]
      %v373 = vlog2.pop %v372
      %v374 = vmul.f32 %v373, 0.6931472
      %v375 = vsel %vm174, %v374, 0.0
      %376 = vadd.xlane.f32.xlu0 %v375
      %v377 = vpop.xlane.xlu0 %376
      %v378 = vrot.slane %v377, 4
      %v379 = vadd.f32 %v377, %v378
      %v380 = vrot.slane %v379, 2
      %v381 = vadd.f32 %v379, %v380
      %v382 = vrot.slane %v381, 1
      %v383 = vadd.f32 %v381, %v382
      %s384 = vtos %v383
      %v385 = vstv %s384
      %v386 = vld [vmem:[#allocation3] sm:$0x1]
      %v387 = vmul.f32 %v386, 8.0
      %v388 = vadd.f32 %v385, %v387
      %v389 = vadd.f32 %v299, %v388
      %v390 = vsub.f32 %v389, %v311
      %v391 = vmul.f32 %v390, 0.0625
      %v392 = vmul.f32 %v323, 100.0
      %v393 = vmul.f32 %v392, 0.125
      %vm394 = vcmp.gt.f32.partialorder %v359, 0.0
      %v395 = vmul.f32 %v335, 100.0
      %v396 = vmax.f32 %v359, 1.0
      %v397 = vrcp.pop %v396
      %v398 = vmul.f32 %v396, %v397
      %v399 = vsub.f32 1.0, %v398
      %v400 = vmul.f32 %v397, %v399
      %v401 = vadd.f32 %v397, %v400
      %vm402 = vweird.f32 %v396
      %vm403 = vweird.f32 %v397
      %vm404 = vmor %vm402, %vm403
      %v405 = vsel %vm404, %v397, %v401
      %v406 = vand.u32 2147483647, %v396
      %vm407 = vcmp.eq.f32.partialorder %v406, 8.507059e+37
      %v408 = vand.u32 %v396, 2147483648
      %v409 = vor.u32 1.1754944e-38, %v408
      %v410 = vsel %vm407, %v409, %v405
      %v411 = vmul.f32 %v395, %v410
      %v412 = vsel %vm394, %v411, 0.0
      %vm413 = vcmp.gt.f32.partialorder %v371, 0.0
      %v414 = vmul.f32 %v347, 100.0
      %v415 = vmax.f32 %v371, 1.0
      %v416 = vrcp.pop %v415
      %v417 = vmul.f32 %v415, %v416
      %v418 = vsub.f32 1.0, %v417
      %v419 = vmul.f32 %v416, %v418
      %v420 = vadd.f32 %v416, %v419
      %vm421 = vweird.f32 %v415
      %vm422 = vweird.f32 %v416
      %vm423 = vmor %vm421, %vm422
      %v424 = vsel %vm423, %v416, %v420
      %v425 = vand.u32 2147483647, %v415
      %vm426 = vcmp.eq.f32.partialorder %v425, 8.507059e+37
      %v427 = vand.u32 %v415, 2147483648
      %v428 = vor.u32 1.1754944e-38, %v427
      %v429 = vsel %vm426, %v428, %v424
      %v430 = vmul.f32 %v414, %v429
      %v431 = vsel %vm413, %v430, 0.0
      %433 = vset.pattern.permute.xlu0 0
      %434 = vperm.xlu0 %433, %v391
      %v435 = vpop.permute.xlu0 %434
      %v437 = vperm.slane %v435, 0
      %v438 = vsel %vm254, %v437, 0.0
      %v439 = vadd.f32 %v438, 0.0
      %v440 = vsel %vm258, %v393, 0.0
      %v441 = vadd.f32 %v439, %v440
      %v442 = vsel %vm262, %v412, 0.0
      %v443 = vadd.f32 %v441, %v442
      %v444 = vsel %vm266, %v431, 0.0
      %v445 = vadd.f32 %v443, %v444
      %v446 = vsel %vm270, %v359, 0.0
      %v447 = vadd.f32 %v445, %v446
      %v448 = vsel %vm274, %v371, 0.0
      %v449 = vadd.f32 %v447, %v448
      %450 = vst.msk [vmem:[#allocation10] sm:$0x1] %vm174, %v449
    $region37: #{tpu_custom_call.1} parent=1 // pred_fallthru
      _
    // Predicated region
    $region38: #{tpu_custom_call.1} parent=1 // pred_check
      _
    $region39: #{tpu_custom_call.1} parent=1 // pred_check_branch
      %452 = sbr.rel (0) target = $region41
    $region40: #{tpu_custom_call.1} parent=1 // pred_region
      %454 = vsyncadd [#allocation7], 0
      %s456 = sshll.u32 [#allocation10], 4
      %s457 = int_to_ptr.vmem [resolvable:$true] %s456
      %s458 = sshll.u32 %s5, 4
      %s459 = int_to_ptr.hbm [resolvable:$true] %s458
      %461 = dma.vmem_to_hbm [thread:$0]  %s457, 16, %s459, [#allocation7]
    $region41: #{tpu_custom_call.1} parent=1 // pred_fallthru
      _
    // Predicated region
    $region42: #{tpu_custom_call.1} parent=1 // pred_check
      _
    $region43: #{tpu_custom_call.1} parent=1 // pred_check_branch
      %463 = sbr.rel (0) target = $region45
    $region44: #{tpu_custom_call.1} parent=1 // pred_region
      %465 = dma.done [#allocation7], 16
    $region45: #{tpu_custom_call.1} parent=1 // pred_fallthru
      _
    %466 = vsyncpa [#allocation6], 1
    %467 = vsyncpa [#allocation7], 1
    %468 = vsyncpa [#allocation8], 1

</llo_original>
